<compile_context>
chip_gen: v7x
topology: tpu7x:2x2x1
jax: 0.10.0
libtpu: 0.0.40
codegen_flags: <defaults>
</compile_context>

<pallas_src>
import functools

import jax
import jax.numpy as jnp
from jax import lax
from jax.experimental import pallas as pl
from jax.experimental.pallas import tpu as pltpu


# ---------------------------------------------------------------------------
# Kernel
# ---------------------------------------------------------------------------
def mlp_kernel(x_ref, w1_ref, b1_ref, w2_ref, b2_ref, w3t_ref, b3t_ref, o_ref,
               *, sub_rows):
    """One (TB, 52) x tile -> one (3, TB) transposed output tile.

    The batch tile is processed in `sub_rows`-row chunks so all intermediates
    stay in vector registers.
    """
    tb = x_ref.shape[0]
    num_sub = tb // sub_rows
    cdt = w1_ref.dtype  # compute dtype (bf16 or f32)

    # Hoist parameter loads out of the sub-block loop (VMEM-resident anyway).
    w1 = w1_ref[...]      # (52, 64)
    b1 = b1_ref[...]      # (1, 64)  f32
    w2 = w2_ref[...]      # (64, 32)
    b2 = b2_ref[...]      # (1, 32)  f32
    w3t = w3t_ref[...]    # (3, 32)
    b3t = b3t_ref[...]    # (3, 1)   f32

    def body(s, carry):
        off = pl.multiple_of(s * sub_rows, sub_rows)
        x_sb = x_ref[pl.ds(off, sub_rows), :]                        # (SB, 52)

        h1 = jnp.dot(x_sb, w1, preferred_element_type=jnp.float32) + b1
        h1 = jnp.maximum(h1, 0.0).astype(cdt)                        # (SB, 64)

        h2 = jnp.dot(h1, w2, preferred_element_type=jnp.float32) + b2
        h2 = jnp.maximum(h2, 0.0).astype(cdt)                        # (SB, 32)

        # Last layer directly in transposed form (A @ B^T pattern):
        #   (3, 32) x (SB, 32)^T -> (3, SB), so the store is lane-dense.
        h3t = lax.dot_general(
            w3t, h2, (((1,), (1,)), ((), ())),
            preferred_element_type=jnp.float32) + b3t                # (3, SB)

        o_ref[:, pl.ds(off, sub_rows)] = (
            jnp.maximum(h3t, 0.0).astype(o_ref.dtype))
        return carry

    unroll = True if num_sub <= 8 else 2
    lax.fori_loop(0, num_sub, body, 0, unroll=unroll)


# ---------------------------------------------------------------------------
# Wrapper
# ---------------------------------------------------------------------------
def _round_up(n, m):
    return ((n + m - 1) // m) * m


def _pick_tile_rows(B, sub_rows):
    sb = max(128, _round_up(int(sub_rows), 128))
    # >= 4 grid steps so v7x's two TensorCores each get >= 2 tiles; cap at
    # 8192 rows to amortize per-grid-step overhead on v5e/v6e.  Lane-dense
    # output keeps the double-buffered footprint ~2 MiB at TB=8192.
    target = -(-B // 4)
    return max(sb, min(8192, _round_up(target, sb)))


def _pallas_forward(x, params, tile_rows, sub_rows, compute_dtype):
    """x: (B, 52) float32 -> (B, 3) float32."""
    B = x.shape[0]
    TB = int(tile_rows)
    SB = int(min(sub_rows, TB))
    assert TB % 8 == 0 and SB % 8 == 0, "tile/sub rows must be multiples of 8"
    assert TB % SB == 0, "tile_rows must be a multiple of sub_rows"
    assert TB % 128 == 0, "tile_rows must be a multiple of 128 (lane-dense out)"

    cdt = compute_dtype
    xc = x.astype(cdt)
    w1 = params["w1"].astype(cdt)                              # (52, 64)
    w2 = params["w2"].astype(cdt)                              # (64, 32)
    w3t = params["w3"].T.astype(cdt)                           # (3, 32)
    b1 = params["b1"].astype(jnp.float32)                      # (1, 64)
    b2 = params["b2"].astype(jnp.float32)                      # (1, 32)
    b3t = params["b3"].reshape(3, 1).astype(jnp.float32)       # (3, 1)

    # Pad batch to a multiple of TB; padded rows are zeros (harmless through
    # the ReLU MLP) and are sliced off before returning.
    B_pad = _round_up(B, TB)
    if B_pad != B:
        xc = jnp.pad(xc, ((0, B_pad - B), (0, 0)))

    grid = (B_pad // TB,)

    def const_map(i):
        return (0, 0)

    kern = functools.partial(mlp_kernel, sub_rows=SB)

    out_t = pl.pallas_call(
        kern,
        out_shape=jax.ShapeDtypeStruct((3, B_pad), jnp.float32),
        grid=grid,
        in_specs=[
            pl.BlockSpec((TB, 52), lambda i: (i, 0)),   # x tile (streamed)
            pl.BlockSpec((52, 64), const_map),          # w1 (VMEM-resident)
            pl.BlockSpec((1, 64), const_map),           # b1
            pl.BlockSpec((64, 32), const_map),          # w2
            pl.BlockSpec((1, 32), const_map),           # b2
            pl.BlockSpec((3, 32), const_map),           # w3^T
            pl.BlockSpec((3, 1), const_map),            # b3 (column)
        ],
        out_specs=pl.BlockSpec((3, TB), lambda i: (0, i)),
        compiler_params=pltpu.CompilerParams(
            dimension_semantics=("parallel",),
            vmem_limit_bytes=32 * 1024 * 1024,
        ),
    )(xc, w1, b1, w2, b2, w3t, b3t)

    # Tiny (3, B) -> (B, 3) relayout outside the kernel.
    return out_t[:, :B].T


def _xla_forward(x, params, compute_dtype=jnp.bfloat16):
    """Plain XLA path with the same dtype semantics as the kernel."""
    cdt = compute_dtype
    h = jnp.maximum(
        jnp.dot(x.astype(cdt), params["w1"].astype(cdt),
                preferred_element_type=jnp.float32) + params["b1"], 0.0)
    h = jnp.maximum(
        jnp.dot(h.astype(cdt), params["w2"].astype(cdt),
                preferred_element_type=jnp.float32) + params["b2"], 0.0)
    h = jnp.maximum(
        jnp.dot(h.astype(cdt), params["w3"].astype(cdt),
                preferred_element_type=jnp.float32) + params["b3"], 0.0)
    return h


def net_forward(x, params, *, tile_rows=None, sub_rows=256, force_pallas=False,
                compute_dtype=jnp.bfloat16):
    """Forward pass of Net.  x: (B, 52) float32 -> (B, 3) float32.

    For small batches the fixed Pallas launch/prologue cost dominates, so we
    dispatch to plain XLA unless force_pallas=True.
    """
    B = x.shape[0]
    # TODO(synk): re-benchmark this XLA-fallback crossover per TPU generation
    # (512-4096 sweep) now that tiles are larger and the output is lane-dense.
    if not force_pallas and B <= 512:
        return _xla_forward(x, params, compute_dtype)
    if tile_rows is None:
        tile_rows = _pick_tile_rows(B, sub_rows)
    return _pallas_forward(x, params, tile_rows, sub_rows, compute_dtype)


# ---------------------------------------------------------------------------
# Parameters / references
# ---------------------------------------------------------------------------
def init_params(key):
    """Deterministic synthetic parameters matching nn.Linear shapes.

    PyTorch stores Linear weight as (out, in); here we keep the transpose
    (in, out) so the kernel does x @ W without an in-kernel transpose.
    """
    ks = jax.random.split(key, 6)

    def linear(kw, kb, fan_in, fan_out):
        bound = 1.0 / jnp.sqrt(fan_in)
        w = jax.random.uniform(kw, (fan_in, fan_out), jnp.float32, -bound, bound)
        b = jax.random.uniform(kb, (1, fan_out), jnp.float32, -bound, bound)
        return w, b

    w1, b1 = linear(ks[0], ks[1], 52, 64)
    w2, b2 = linear(ks[2], ks[3], 64, 32)
    w3, b3 = linear(ks[4], ks[5], 32, 3)
    return {"w1": w1, "b1": b1, "w2": w2, "b2": b2, "w3": w3, "b3": b3}


def reference_forward_f32(x, params):
    h = jnp.maximum(x @ params["w1"] + params["b1"], 0.0)
    h = jnp.maximum(h @ params["w2"] + params["b2"], 0.0)
    return jnp.maximum(h @ params["w3"] + params["b3"], 0.0)


# ---------------------------------------------------------------------------
# Main
# ---------------------------------------------------------------------------
if __name__ == "__main__":
    key = jax.random.PRNGKey(0)
    k_x1, k_x2, k_p = jax.random.split(key, 3)
    params = init_params(k_p)

    # Test 1: single grid step, two inner sub-blocks (exercises the
    # register-resident loop + padding path).
    B1 = 8
    x1 = jax.random.normal(k_x1, (B1, 52), dtype=jnp.float32)
    out1 = net_forward(x1, params, tile_rows=256, sub_rows=128,
                       force_pallas=True)
    out1 = jax.block_until_ready(out1)
    ref1 = _xla_forward(x1, params)
    ref1_f32 = reference_forward_f32(x1, params)
    assert out1.shape == (B1, 3)
    assert jnp.allclose(out1, ref1, atol=1e-4, rtol=1e-4)
    assert jnp.allclose(out1, ref1_f32, atol=1e-1, rtol=1e-1)  # bf16 sanity

    # Test 2: ragged batch spanning 3 grid steps (padding + multi-tile,
    # lane-dense transposed output across tiles).
    B2 = 300
    x2 = jax.random.normal(k_x2, (B2, 52), dtype=jnp.float32)
    out2 = net_forward(x2, params, tile_rows=128, sub_rows=128,
                       force_pallas=True)
    out2 = jax.block_until_ready(out2)
    ref2 = _xla_forward(x2, params)
    ref2_f32 = reference_forward_f32(x2, params)
    assert out2.shape == (B2, 3)
    assert jnp.allclose(out2, ref2, atol=1e-4, rtol=1e-4)
    assert jnp.allclose(out2, ref2_f32, atol=1e-1, rtol=1e-1)  # bf16 sanity

    print("KERNEL_OK")
</pallas_src>

<mosaic_0001>
module attributes {stable_mosaic.version = 11 : i64} {
  func.func @mlp_kernel(%arg0: i32, %arg1: memref<256x52xbf16, #tpu.memory_space<vmem>>, %arg2: memref<52x64xbf16, #tpu.memory_space<vmem>>, %arg3: memref<1x64xf32, #tpu.memory_space<vmem>>, %arg4: memref<64x32xbf16, #tpu.memory_space<vmem>>, %arg5: memref<1x32xf32, #tpu.memory_space<vmem>>, %arg6: memref<3x32xbf16, #tpu.memory_space<vmem>>, %arg7: memref<3x1xf32, #tpu.memory_space<vmem>>, %arg8: memref<3x256xf32, #tpu.memory_space<vmem>>) attributes {dimension_semantics = [#tpu.dimension_semantics<parallel>], iteration_bounds = array<i64: 1>, scalar_prefetch = 0 : i64, scratch_operands = 0 : i64, tpu.core_type = #tpu.core_type<tc>, window_params = [{transform_indices = @transform_0, window_bounds = array<i64: 256, 52>}, {pipeline_mode = #tpu.pipeline_mode<synchronous>, transform_indices = @transform_1, window_bounds = array<i64: 52, 64>}, {pipeline_mode = #tpu.pipeline_mode<synchronous>, transform_indices = @transform_2, window_bounds = array<i64: 1, 64>}, {pipeline_mode = #tpu.pipeline_mode<synchronous>, transform_indices = @transform_3, window_bounds = array<i64: 64, 32>}, {pipeline_mode = #tpu.pipeline_mode<synchronous>, transform_indices = @transform_4, window_bounds = array<i64: 1, 32>}, {pipeline_mode = #tpu.pipeline_mode<synchronous>, transform_indices = @transform_5, window_bounds = array<i64: 3, 32>}, {pipeline_mode = #tpu.pipeline_mode<synchronous>, transform_indices = @transform_6, window_bounds = array<i64: 3, 1>}, {transform_indices = @transform_7, window_bounds = array<i64: 3, 256>}]} {
    %c0 = arith.constant 0 : index
    %c0_0 = arith.constant 0 : index
    %0 = vector.load %arg2[%c0, %c0_0] : memref<52x64xbf16, #tpu.memory_space<vmem>>, vector<52x64xbf16>
    %c0_1 = arith.constant 0 : index
    %c0_2 = arith.constant 0 : index
    %1 = vector.load %arg3[%c0_1, %c0_2] : memref<1x64xf32, #tpu.memory_space<vmem>>, vector<1x64xf32>
    %c0_3 = arith.constant 0 : index
    %c0_4 = arith.constant 0 : index
    %2 = vector.load %arg4[%c0_3, %c0_4] : memref<64x32xbf16, #tpu.memory_space<vmem>>, vector<64x32xbf16>
    %c0_5 = arith.constant 0 : index
    %c0_6 = arith.constant 0 : index
    %3 = vector.load %arg5[%c0_5, %c0_6] : memref<1x32xf32, #tpu.memory_space<vmem>>, vector<1x32xf32>
    %c0_7 = arith.constant 0 : index
    %c0_8 = arith.constant 0 : index
    %4 = vector.load %arg6[%c0_7, %c0_8] : memref<3x32xbf16, #tpu.memory_space<vmem>>, vector<3x32xbf16>
    %c0_9 = arith.constant 0 : index
    %c0_10 = arith.constant 0 : index
    %5 = vector.load %arg7[%c0_9, %c0_10] : memref<3x1xf32, #tpu.memory_space<vmem>>, vector<3x1xf32>
    %c0_i32 = arith.constant 0 : i32
    %c128_i32 = arith.constant 128 : i32
    %6 = arith.muli %c0_i32, %c128_i32 : i32
    %7 = tpu.assume_multiple %6, 128 : i32
    %8 = arith.index_cast %7 : i32 to index
    %c0_11 = arith.constant 0 : index
    %9 = vector.load %arg1[%8, %c0_11] : memref<256x52xbf16, #tpu.memory_space<vmem>>, vector<128x52xbf16>
    %cst = arith.constant dense<0.000000e+00> : vector<128x64xf32>
    %10 = tpu.matmul %9, %0, %cst {dimension_numbers = #tpu.dot_dimension_numbers<[1], [0], [0], [1], [0, 0, 1, 1], [], []>} : vector<128x52xbf16>, vector<52x64xbf16>, vector<128x64xf32> -> vector<128x64xf32>
    %11 = vector.broadcast %1 : vector<1x64xf32> to vector<128x64xf32>
    %12 = arith.addf %10, %11 : vector<128x64xf32>
    %cst_12 = arith.constant 0.000000e+00 : f32
    %13 = vector.broadcast %cst_12 : f32 to vector<128x64xf32>
    %14 = arith.maximumf %12, %13 : vector<128x64xf32>
    %15 = arith.truncf %14 : vector<128x64xf32> to vector<128x64xbf16>
    %cst_13 = arith.constant dense<0.000000e+00> : vector<128x32xf32>
    %16 = tpu.matmul %15, %2, %cst_13 {dimension_numbers = #tpu.dot_dimension_numbers<[1], [0], [0], [1], [0, 0, 1, 1], [], []>} : vector<128x64xbf16>, vector<64x32xbf16>, vector<128x32xf32> -> vector<128x32xf32>
    %17 = vector.broadcast %3 : vector<1x32xf32> to vector<128x32xf32>
    %18 = arith.addf %16, %17 : vector<128x32xf32>
    %cst_14 = arith.constant 0.000000e+00 : f32
    %19 = vector.broadcast %cst_14 : f32 to vector<128x32xf32>
    %20 = arith.maximumf %18, %19 : vector<128x32xf32>
    %21 = arith.truncf %20 : vector<128x32xf32> to vector<128x32xbf16>
    %cst_15 = arith.constant dense<0.000000e+00> : vector<3x128xf32>
    %22 = tpu.matmul %4, %21, %cst_15 {dimension_numbers = #tpu.dot_dimension_numbers<[1], [1], [0], [0], [0, 0, 1, 0], [], []>} : vector<3x32xbf16>, vector<128x32xbf16>, vector<3x128xf32> -> vector<3x128xf32>
    %23 = vector.broadcast %5 : vector<3x1xf32> to vector<3x128xf32>
    %24 = arith.addf %22, %23 : vector<3x128xf32>
    %cst_16 = arith.constant 0.000000e+00 : f32
    %25 = vector.broadcast %cst_16 : f32 to vector<3x128xf32>
    %26 = arith.maximumf %24, %25 : vector<3x128xf32>
    %c0_17 = arith.constant 0 : index
    %27 = arith.index_cast %7 : i32 to index
    %28 = vector.load %arg8[%c0_17, %27] : memref<3x256xf32, #tpu.memory_space<vmem>>, vector<3x128xf32>
    tpu.vector_store %arg8[%c0_17, %27], %26 {strides = array<i32>} : memref<3x256xf32, #tpu.memory_space<vmem>>, vector<3x128xf32>,
    %c1_i32 = arith.constant 1 : i32
    %c128_i32_18 = arith.constant 128 : i32
    %29 = arith.muli %c1_i32, %c128_i32_18 : i32
    %30 = tpu.assume_multiple %29, 128 : i32
    %31 = arith.index_cast %30 : i32 to index
    %c0_19 = arith.constant 0 : index
    %32 = vector.load %arg1[%31, %c0_19] : memref<256x52xbf16, #tpu.memory_space<vmem>>, vector<128x52xbf16>
    %cst_20 = arith.constant dense<0.000000e+00> : vector<128x64xf32>
    %33 = tpu.matmul %32, %0, %cst_20 {dimension_numbers = #tpu.dot_dimension_numbers<[1], [0], [0], [1], [0, 0, 1, 1], [], []>} : vector<128x52xbf16>, vector<52x64xbf16>, vector<128x64xf32> -> vector<128x64xf32>
    %34 = vector.broadcast %1 : vector<1x64xf32> to vector<128x64xf32>
    %35 = arith.addf %33, %34 : vector<128x64xf32>
    %cst_21 = arith.constant 0.000000e+00 : f32
    %36 = vector.broadcast %cst_21 : f32 to vector<128x64xf32>
    %37 = arith.maximumf %35, %36 : vector<128x64xf32>
    %38 = arith.truncf %37 : vector<128x64xf32> to vector<128x64xbf16>
    %cst_22 = arith.constant dense<0.000000e+00> : vector<128x32xf32>
    %39 = tpu.matmul %38, %2, %cst_22 {dimension_numbers = #tpu.dot_dimension_numbers<[1], [0], [0], [1], [0, 0, 1, 1], [], []>} : vector<128x64xbf16>, vector<64x32xbf16>, vector<128x32xf32> -> vector<128x32xf32>
    %40 = vector.broadcast %3 : vector<1x32xf32> to vector<128x32xf32>
    %41 = arith.addf %39, %40 : vector<128x32xf32>
    %cst_23 = arith.constant 0.000000e+00 : f32
    %42 = vector.broadcast %cst_23 : f32 to vector<128x32xf32>
    %43 = arith.maximumf %41, %42 : vector<128x32xf32>
    %44 = arith.truncf %43 : vector<128x32xf32> to vector<128x32xbf16>
    %cst_24 = arith.constant dense<0.000000e+00> : vector<3x128xf32>
    %45 = tpu.matmul %4, %44, %cst_24 {dimension_numbers = #tpu.dot_dimension_numbers<[1], [1], [0], [0], [0, 0, 1, 0], [], []>} : vector<3x32xbf16>, vector<128x32xbf16>, vector<3x128xf32> -> vector<3x128xf32>
    %46 = vector.broadcast %5 : vector<3x1xf32> to vector<3x128xf32>
    %47 = arith.addf %45, %46 : vector<3x128xf32>
    %cst_25 = arith.constant 0.000000e+00 : f32
    %48 = vector.broadcast %cst_25 : f32 to vector<3x128xf32>
    %49 = arith.maximumf %47, %48 : vector<3x128xf32>
    %c0_26 = arith.constant 0 : index
    %50 = arith.index_cast %30 : i32 to index
    %51 = vector.load %arg8[%c0_26, %50] : memref<3x256xf32, #tpu.memory_space<vmem>>, vector<3x128xf32>
    tpu.vector_store %arg8[%c0_26, %50], %49 {strides = array<i32>} : memref<3x256xf32, #tpu.memory_space<vmem>>, vector<3x128xf32>,
    %c2_i32 = arith.constant 2 : i32
    return
  }
  func.func @transform_0(%arg0: i32) -> (i32, i32) {
    %c0_i32 = arith.constant 0 : i32
    %c0_i32_0 = arith.constant 0 : i32
    return %arg0, %c0_i32 : i32, i32
  }
  func.func @transform_1(%arg0: i32) -> (i32, i32) {
    %c0_i32 = arith.constant 0 : i32
    %c0_i32_0 = arith.constant 0 : i32
    %c0_i32_1 = arith.constant 0 : i32
    return %c0_i32, %c0_i32_0 : i32, i32
  }
  func.func @transform_2(%arg0: i32) -> (i32, i32) {
    %c0_i32 = arith.constant 0 : i32
    %c0_i32_0 = arith.constant 0 : i32
    %c0_i32_1 = arith.constant 0 : i32
    return %c0_i32, %c0_i32_0 : i32, i32
  }
  func.func @transform_3(%arg0: i32) -> (i32, i32) {
    %c0_i32 = arith.constant 0 : i32
    %c0_i32_0 = arith.constant 0 : i32
    %c0_i32_1 = arith.constant 0 : i32
    return %c0_i32, %c0_i32_0 : i32, i32
  }
  func.func @transform_4(%arg0: i32) -> (i32, i32) {
    %c0_i32 = arith.constant 0 : i32
    %c0_i32_0 = arith.constant 0 : i32
    %c0_i32_1 = arith.constant 0 : i32
    return %c0_i32, %c0_i32_0 : i32, i32
  }
  func.func @transform_5(%arg0: i32) -> (i32, i32) {
    %c0_i32 = arith.constant 0 : i32
    %c0_i32_0 = arith.constant 0 : i32
    %c0_i32_1 = arith.constant 0 : i32
    return %c0_i32, %c0_i32_0 : i32, i32
  }
  func.func @transform_6(%arg0: i32) -> (i32, i32) {
    %c0_i32 = arith.constant 0 : i32
    %c0_i32_0 = arith.constant 0 : i32
    %c0_i32_1 = arith.constant 0 : i32
    return %c0_i32, %c0_i32_0 : i32, i32
  }
  func.func @transform_7(%arg0: i32) -> (i32, i32) {
    %c0_i32 = arith.constant 0 : i32
    %c0_i32_0 = arith.constant 0 : i32
    return %c0_i32, %arg0 : i32, i32
  }
}

</mosaic_0001>

<llo_original>
// kernel: tpu_custom_call.1
$region0: #{tpu_custom_call.1}
  #allocation0 [shape = 'u32[]', space=smem, size = 0x4, offset = 0x4, fixed_abs, tag = 'smem constant byte address 0x4 - core index']
  #allocation1 [shape = 'u32[144,128]{1,0:T(1,128)}', space=vmem, size = 0x12000, scoped, tag = 'internal scratch']
  %s0 = inlined_call_operand.vmem [shape: bf16[256,52], index: 0, kind: input, shape index: {}]
  %s1 = inlined_call_operand.vmem [shape: bf16[52,64], index: 1, kind: input, shape index: {}]
  %s2 = inlined_call_operand.vmem [shape: f32[1,64], index: 2, kind: input, shape index: {}]
  %s3 = inlined_call_operand.vmem [shape: bf16[64,32], index: 3, kind: input, shape index: {}]
  %s4 = inlined_call_operand.vmem [shape: f32[1,32], index: 4, kind: input, shape index: {}]
  %s5 = inlined_call_operand.vmem [shape: bf16[3,32], index: 5, kind: input, shape index: {}]
  %s6 = inlined_call_operand.vmem [shape: f32[3,1], index: 6, kind: input, shape index: {}]
  %s7 = inlined_call_operand.hbm [shape: f32[3,256], index: 7, kind: output, shape index: {}]
  %s8 = sld [smem:[#allocation0]]
  $region38: #{tpu_custom_call.1} parent=0
    _
  %s10 = ssub.s32 1, %s8
  %s11 = scalar_select 0, %s10, %s8
  $region1: #{tpu_custom_call.1} parent=0
    #allocation2 [shape = 'u8[4096]{0}', space=vmem, size = 0x1000, scoped, tag = 'output window, operand 0, single buffered']
    #allocation3 [shape = 's32[1]{0}', space=sflag, size = 0x4, scoped, tag = 'scoped memory for tpu_custom_call.1']
    %12 = vsyncpa [#allocation3], 0
    // Predicated region
    $region2: #{tpu_custom_call.1} parent=1 // pred_check
      _
    $region3: #{tpu_custom_call.1} parent=1 // pred_check_branch
      %14 = sbr.rel (0) target = $region5
    $region4: #{tpu_custom_call.1} parent=1 // pred_region
      _
    $region5: #{tpu_custom_call.1} parent=1 // pred_fallthru
      _
    // Predicated region
    $region6: #{tpu_custom_call.1} parent=1 // pred_check
      _
    $region7: #{tpu_custom_call.1} parent=1 // pred_check_branch
      %16 = sbr.rel (0) target = $region9
    $region8: #{tpu_custom_call.1} parent=1 // pred_region
      _
    $region9: #{tpu_custom_call.1} parent=1 // pred_fallthru
      _
    // Predicated region
    $region10: #{tpu_custom_call.1} parent=1 // pred_check
      _
    $region11: #{tpu_custom_call.1} parent=1 // pred_check_branch
      %18 = sbr.rel (0) target = $region13
    $region12: #{tpu_custom_call.1} parent=1 // pred_region
      _
    $region13: #{tpu_custom_call.1} parent=1 // pred_fallthru
      _
    // Predicated region
    $region14: #{tpu_custom_call.1} parent=1 // pred_check
      _
    $region15: #{tpu_custom_call.1} parent=1 // pred_check_branch
      %20 = sbr.rel (0) target = $region17
    $region16: #{tpu_custom_call.1} parent=1 // pred_region
      _
    $region17: #{tpu_custom_call.1} parent=1 // pred_fallthru
      _
    // Predicated region
    $region18: #{tpu_custom_call.1} parent=1 // pred_check
      _
    $region19: #{tpu_custom_call.1} parent=1 // pred_check_branch
      %22 = sbr.rel (0) target = $region21
    $region20: #{tpu_custom_call.1} parent=1 // pred_region
      _
    $region21: #{tpu_custom_call.1} parent=1 // pred_fallthru
      _
    // Predicated region
    $region22: #{tpu_custom_call.1} parent=1 // pred_check
      _
    $region23: #{tpu_custom_call.1} parent=1 // pred_check_branch
      %24 = sbr.rel (0) target = $region25
    $region24: #{tpu_custom_call.1} parent=1 // pred_region
      _
    $region25: #{tpu_custom_call.1} parent=1 // pred_fallthru
      _
    // Predicated region
    $region26: #{tpu_custom_call.1} parent=1 // pred_check
      _
    $region27: #{tpu_custom_call.1} parent=1 // pred_check_branch
      %26 = sbr.rel (0) target = $region29
    $region28: #{tpu_custom_call.1} parent=1 // pred_region
      _
    $region29: #{tpu_custom_call.1} parent=1 // pred_fallthru
      _
    %v28 = vld [vmem:[%s1] sm:$0xf]
    %v29 = vld [vmem:[%s1 + $0x4] sm:$0xf]
    %v30 = vld [vmem:[%s1 + $0x8] sm:$0xf]
    %v31 = vld [vmem:[%s1 + $0xc] sm:$0xf]
    %v32 = vld [vmem:[%s1 + $0x10] sm:$0xf]
    %v33 = vld [vmem:[%s1 + $0x14] sm:$0xf]
    %v34 = vld [vmem:[%s1 + $0x18] sm:$0x3]
    %v35 = vld [vmem:[%s2] sm:$0x1]
    %v36 = vld [vmem:[%s3] sm:$0xf]
    %v37 = vld [vmem:[%s3 + $0x4] sm:$0xf]
    %v38 = vld [vmem:[%s3 + $0x8] sm:$0xf]
    %v39 = vld [vmem:[%s3 + $0xc] sm:$0xf]
    %v40 = vld [vmem:[%s3 + $0x10] sm:$0xf]
    %v41 = vld [vmem:[%s3 + $0x14] sm:$0xf]
    %v42 = vld [vmem:[%s3 + $0x18] sm:$0xf]
    %v43 = vld [vmem:[%s3 + $0x1c] sm:$0xf]
    %v44 = vld [vmem:[%s4] sm:$0x1]
    %v45 = vld [vmem:[%s5] sm:$0x3]
    %v46 = vld [vmem:[%s6] sm:$0x7]
    %v47 = vld [vmem:[%s0] sm:$0xf]
    %v48 = vld [vmem:[%s0 + $0x4] sm:$0xf]
    %v49 = vld [vmem:[%s0 + $0x8] sm:$0xf]
    %v50 = vld [vmem:[%s0 + $0xc] sm:$0xf]
    %v51 = vld [vmem:[%s0 + $0x10] sm:$0xf]
    %v52 = vld [vmem:[%s0 + $0x14] sm:$0xf]
    %v53 = vld [vmem:[%s0 + $0x18] sm:$0xf]
    %v54 = vld [vmem:[%s0 + $0x1c] sm:$0xf]
    %v55 = vld [vmem:[%s0 + $0x20] sm:$0xf]
    %v56 = vld [vmem:[%s0 + $0x24] sm:$0xf]
    %v57 = vld [vmem:[%s0 + $0x28] sm:$0xf]
    %v58 = vld [vmem:[%s0 + $0x2c] sm:$0xf]
    %v59 = vld [vmem:[%s0 + $0x30] sm:$0xf]
    %v60 = vld [vmem:[%s0 + $0x34] sm:$0xf]
    %v61 = vld [vmem:[%s0 + $0x38] sm:$0xf]
    %v62 = vld [vmem:[%s0 + $0x3c] sm:$0xf]
    %v64 = vlaneseq
    %v65 = vshrl.u32 %v64, 7
    %v66 = vsub.s32 0, %v65
    %v67 = vrot.slane %v35, %v66
    %v85 = vunpack.c.l.b16 %v47
    %v86 = vunpack.c.l.b16 %v48
    %v87 = vunpack.c.l.b16 %v49
    %v88 = vunpack.c.l.b16 %v50
    %v89 = vunpack.c.l.b16 %v51
    %v90 = vunpack.c.l.b16 %v52
    %v91 = vunpack.c.l.b16 %v53
    %v92 = vunpack.c.l.b16 %v54
    %v93 = vunpack.c.l.b16 %v55
    %v94 = vunpack.c.l.b16 %v56
    %v95 = vunpack.c.l.b16 %v57
    %v96 = vunpack.c.l.b16 %v58
    %v97 = vunpack.c.l.b16 %v59
    %v98 = vunpack.c.l.b16 %v60
    %v99 = vunpack.c.l.b16 %v61
    %v100 = vunpack.c.l.b16 %v62
    %v101 = vpack.c.b16 %v86, %v85
    %v102 = vpack.c.b16 %v88, %v87
    %v103 = vpack.c.b16 %v90, %v89
    %v104 = vpack.c.b16 %v92, %v91
    %v105 = vpack.c.b16 %v94, %v93
    %v106 = vpack.c.b16 %v96, %v95
    %v107 = vpack.c.b16 %v98, %v97
    %v108 = vpack.c.b16 %v100, %v99
    %v116 = vunpack.c.l.b16 %v28
    %v117 = vunpack.c.l.b16 %v29
    %v118 = vunpack.c.l.b16 %v30
    %v119 = vunpack.c.l.b16 %v31
    %v120 = vunpack.c.l.b16 %v32
    %v121 = vunpack.c.l.b16 %v33
    %v122 = vunpack.c.l.b16 %v34
    %v123 = vpack.c.b16 %v117, %v116
    %v124 = vpack.c.b16 %v119, %v118
    %v125 = vpack.c.b16 %v121, %v120
    %v126 = vpack.c.b16 %v122, %v122
    %vm130 = vcmask 424960
    %v132 = vsel %vm130, %v101, 0
    %v135 = vsel %vm130, %v102, 0
    %v138 = vsel %vm130, %v103, 0
    %v141 = vsel %vm130, %v104, 0
    %v144 = vsel %vm130, %v105, 0
    %v147 = vsel %vm130, %v106, 0
    %v150 = vsel %vm130, %v107, 0
    %v153 = vsel %vm130, %v108, 0
    %vm155 = vcmask 1041408
    %v157 = vsel %vm155, %v126, 0
    %159 = vmatprep.subr.bf16.mxu0 0
    %160 = vmatpush1.bf16.msra.mxu0 %v123
    %161 = vmatprep.subr.bf16.mxu0 0
    %162 = vmatpush1.bf16.msra.mxu0 %v124
    %163 = vmatprep.subr.bf16.mxu0 0
    %164 = vmatpush1.bf16.msra.mxu0 %v125
    %165 = vmatprep.subr.bf16.mxu0 0
    %166 = vmatpush1.bf16.msra.mxu0 %v157
    %167 = vmatprep.subr.bf16.mxu0 0
    %168 = vmatpush1.bf16.msra.mxu0 0
    %169 = vmatprep.subr.bf16.mxu0 0
    %170 = vmatpush1.bf16.msra.mxu0 0
    %171 = vmatprep.subr.bf16.mxu0 0
    %172 = vmatpush1.bf16.msra.mxu0 0
    %173 = vmatprep.subr.bf16.mxu0 0
    %174 = vmatpush1.bf16.msra.mxu0 0
    %175 = vmatprep.subr.bf16.mxu0 0
    %176 = vmatpush1.bf16.msra.mxu0 0
    %177 = vmatprep.subr.bf16.mxu0 0
    %178 = vmatpush1.bf16.msra.mxu0 0
    %179 = vmatprep.subr.bf16.mxu0 0
    %180 = vmatpush1.bf16.msra.mxu0 0
    %181 = vmatprep.subr.bf16.mxu0 0
    %182 = vmatpush1.bf16.msra.mxu0 0
    %183 = vmatprep.subr.bf16.mxu0 0
    %184 = vmatpush1.bf16.msra.mxu0 0
    %185 = vmatprep.subr.bf16.mxu0 0
    %186 = vmatpush1.bf16.msra.mxu0 0
    %187 = vmatprep.subr.bf16.mxu0 0
    %188 = vmatpush1.bf16.msra.mxu0 0
    %189 = vmatprep.subr.bf16.mxu0 0
    %190 = vmatpush1.bf16.msra.mxu0 0
    %191 = vmatprep.mubr.bf16.mxu0 0
    %192 = vmatmul.mubr.bf16.gmra.mrb[0].mxu0 %v132
    %v193 = vpop.f32.mrb[0].mxu0
    %v194 = vadd.f32 %v67, %v193
    %v195 = vpop.f32.mrb[0].mxu0
    %v196 = vpop.f32.mrb[0].mxu0
    %v197 = vadd.f32 %v67, %v196
    %v198 = vpop.f32.mrb[0].mxu0
    %199 = vmatprep.mubr.bf16.mxu0 0
    %200 = vmatmul.mubr.bf16.gmra.mrb[0].mxu0 %v135
    %v201 = vpop.f32.mrb[0].mxu0
    %v202 = vadd.f32 %v67, %v201
    %v203 = vpop.f32.mrb[0].mxu0
    %v204 = vpop.f32.mrb[0].mxu0
    %v205 = vadd.f32 %v67, %v204
    %v206 = vpop.f32.mrb[0].mxu0
    %207 = vmatprep.mubr.bf16.mxu0 0
    %208 = vmatmul.mubr.bf16.gmra.mrb[0].mxu0 %v138
    %v209 = vpop.f32.mrb[0].mxu0
    %v210 = vadd.f32 %v67, %v209
    %v211 = vpop.f32.mrb[0].mxu0
    %v212 = vpop.f32.mrb[0].mxu0
    %v213 = vadd.f32 %v67, %v212
    %v214 = vpop.f32.mrb[0].mxu0
    %215 = vmatprep.mubr.bf16.mxu0 0
    %216 = vmatmul.mubr.bf16.gmra.mrb[0].mxu0 %v141
    %v217 = vpop.f32.mrb[0].mxu0
    %v218 = vadd.f32 %v67, %v217
    %v219 = vpop.f32.mrb[0].mxu0
    %v220 = vpop.f32.mrb[0].mxu0
    %v221 = vadd.f32 %v67, %v220
    %v222 = vpop.f32.mrb[0].mxu0
    %223 = vmatprep.mubr.bf16.mxu0 0
    %224 = vmatmul.mubr.bf16.gmra.mrb[0].mxu0 %v144
    %v225 = vpop.f32.mrb[0].mxu0
    %v226 = vadd.f32 %v67, %v225
    %v227 = vpop.f32.mrb[0].mxu0
    %v228 = vpop.f32.mrb[0].mxu0
    %v229 = vadd.f32 %v67, %v228
    %v230 = vpop.f32.mrb[0].mxu0
    %231 = vmatprep.mubr.bf16.mxu0 0
    %232 = vmatmul.mubr.bf16.gmra.mrb[0].mxu0 %v147
    %v233 = vpop.f32.mrb[0].mxu0
    %v234 = vadd.f32 %v67, %v233
    %v235 = vpop.f32.mrb[0].mxu0
    %v236 = vpop.f32.mrb[0].mxu0
    %v237 = vadd.f32 %v67, %v236
    %v238 = vpop.f32.mrb[0].mxu0
    %239 = vmatprep.mubr.bf16.mxu0 0
    %240 = vmatmul.mubr.bf16.gmra.mrb[0].mxu0 %v150
    %v241 = vpop.f32.mrb[0].mxu0
    %v242 = vadd.f32 %v67, %v241
    %v243 = vpop.f32.mrb[0].mxu0
    %v244 = vpop.f32.mrb[0].mxu0
    %v245 = vadd.f32 %v67, %v244
    %v246 = vpop.f32.mrb[0].mxu0
    %247 = vmatprep.mubr.bf16.mxu0 0
    %248 = vmatmul.mubr.bf16.gmra.mrb[0].mxu0 %v153
    %v249 = vpop.f32.mrb[0].mxu0
    %v250 = vadd.f32 %v67, %v249
    %v251 = vpop.f32.mrb[0].mxu0
    %v252 = vpop.f32.mrb[0].mxu0
    %v253 = vadd.f32 %v67, %v252
    %v254 = vpop.f32.mrb[0].mxu0
    %255 = vdwg.mxu0
    %v256 = vmax.f32 %v194, 0.0
    %v257 = vmax.f32 %v197, 0.0
    %v258 = vmax.f32 %v202, 0.0
    %v259 = vmax.f32 %v205, 0.0
    %v260 = vmax.f32 %v210, 0.0
    %v261 = vmax.f32 %v213, 0.0
    %v262 = vmax.f32 %v218, 0.0
    %v263 = vmax.f32 %v221, 0.0
    %v264 = vmax.f32 %v226, 0.0
    %v265 = vmax.f32 %v229, 0.0
    %v266 = vmax.f32 %v234, 0.0
    %v267 = vmax.f32 %v237, 0.0
    %v268 = vmax.f32 %v242, 0.0
    %v269 = vmax.f32 %v245, 0.0
    %v270 = vmax.f32 %v250, 0.0
    %v271 = vmax.f32 %v253, 0.0
    %v272 = vpack.c.bf16 %v257, %v256
    %v273 = vpack.c.bf16 %v259, %v258
    %v274 = vpack.c.bf16 %v261, %v260
    %v275 = vpack.c.bf16 %v263, %v262
    %v276 = vpack.c.bf16 %v265, %v264
    %v277 = vpack.c.bf16 %v267, %v266
    %v278 = vpack.c.bf16 %v269, %v268
    %v279 = vpack.c.bf16 %v271, %v270
    %v281 = vlaneseq
    %v282 = vshrl.u32 %v281, 7
    %v283 = vsub.s32 0, %v282
    %v284 = vrot.slane %v44, %v283
    %v294 = vunpack.c.l.b16 %v36
    %v295 = vunpack.c.l.b16 %v37
    %v296 = vunpack.c.l.b16 %v38
    %v297 = vunpack.c.l.b16 %v39
    %v298 = vunpack.c.l.b16 %v40
    %v299 = vunpack.c.l.b16 %v41
    %v300 = vunpack.c.l.b16 %v42
    %v301 = vunpack.c.l.b16 %v43
    %v302 = vpack.c.b16 %v295, %v294
    %v303 = vpack.c.b16 %v297, %v296
    %v304 = vpack.c.b16 %v299, %v298
    %v305 = vpack.c.b16 %v301, %v300
    %vm310 = vcmask 523264
    %v312 = vsel %vm310, %v272, 0
    %v315 = vsel %vm310, %v273, 0
    %v318 = vsel %vm310, %v274, 0
    %v321 = vsel %vm310, %v275, 0
    %v324 = vsel %vm310, %v276, 0
    %v327 = vsel %vm310, %v277, 0
    %v330 = vsel %vm310, %v278, 0
    %v333 = vsel %vm310, %v279, 0
    %335 = vmatprep.subr.bf16.mxu0 0
    %336 = vmatpush1.bf16.msra.mxu0 %v302
    %337 = vmatprep.subr.bf16.mxu0 0
    %338 = vmatpush1.bf16.msra.mxu0 %v303
    %339 = vmatprep.subr.bf16.mxu0 0
    %340 = vmatpush1.bf16.msra.mxu0 %v304
    %341 = vmatprep.subr.bf16.mxu0 0
    %342 = vmatpush1.bf16.msra.mxu0 %v305
    %343 = vmatprep.subr.bf16.mxu0 0
    %344 = vmatpush1.bf16.msra.mxu0 0
    %345 = vmatprep.subr.bf16.mxu0 0
    %346 = vmatpush1.bf16.msra.mxu0 0
    %347 = vmatprep.subr.bf16.mxu0 0
    %348 = vmatpush1.bf16.msra.mxu0 0
    %349 = vmatprep.subr.bf16.mxu0 0
    %350 = vmatpush1.bf16.msra.mxu0 0
    %351 = vmatprep.subr.bf16.mxu0 0
    %352 = vmatpush1.bf16.msra.mxu0 0
    %353 = vmatprep.subr.bf16.mxu0 0
    %354 = vmatpush1.bf16.msra.mxu0 0
    %355 = vmatprep.subr.bf16.mxu0 0
    %356 = vmatpush1.bf16.msra.mxu0 0
    %357 = vmatprep.subr.bf16.mxu0 0
    %358 = vmatpush1.bf16.msra.mxu0 0
    %359 = vmatprep.subr.bf16.mxu0 0
    %360 = vmatpush1.bf16.msra.mxu0 0
    %361 = vmatprep.subr.bf16.mxu0 0
    %362 = vmatpush1.bf16.msra.mxu0 0
    %363 = vmatprep.subr.bf16.mxu0 0
    %364 = vmatpush1.bf16.msra.mxu0 0
    %365 = vmatprep.subr.bf16.mxu0 0
    %366 = vmatpush1.bf16.msra.mxu0 0
    %367 = vmatprep.mubr.bf16.mxu0 0
    %368 = vmatmul.mubr.bf16.gmra.mrb[0].mxu0 %v312
    %v369 = vpop.f32.mrb[0].mxu0
    %v370 = vadd.f32 %v284, %v369
    %v371 = vpop.f32.mrb[0].mxu0
    %v372 = vpop.f32.mrb[0].mxu0
    %v373 = vadd.f32 %v284, %v372
    %v374 = vpop.f32.mrb[0].mxu0
    %375 = vmatprep.mubr.bf16.mxu0 0
    %376 = vmatmul.mubr.bf16.gmra.mrb[0].mxu0 %v315
    %v377 = vpop.f32.mrb[0].mxu0
    %v378 = vadd.f32 %v284, %v377
    %v379 = vpop.f32.mrb[0].mxu0
    %v380 = vpop.f32.mrb[0].mxu0
    %v381 = vadd.f32 %v284, %v380
    %v382 = vpop.f32.mrb[0].mxu0
    %383 = vmatprep.mubr.bf16.mxu0 0
    %384 = vmatmul.mubr.bf16.gmra.mrb[0].mxu0 %v318
    %v385 = vpop.f32.mrb[0].mxu0
    %v386 = vadd.f32 %v284, %v385
    %v387 = vpop.f32.mrb[0].mxu0
    %v388 = vpop.f32.mrb[0].mxu0
    %v389 = vadd.f32 %v284, %v388
    %v390 = vpop.f32.mrb[0].mxu0
    %391 = vmatprep.mubr.bf16.mxu0 0
    %392 = vmatmul.mubr.bf16.gmra.mrb[0].mxu0 %v321
    %v393 = vpop.f32.mrb[0].mxu0
    %v394 = vadd.f32 %v284, %v393
    %v395 = vpop.f32.mrb[0].mxu0
    %v396 = vpop.f32.mrb[0].mxu0
    %v397 = vadd.f32 %v284, %v396
    %v398 = vpop.f32.mrb[0].mxu0
    %399 = vmatprep.mubr.bf16.mxu0 0
    %400 = vmatmul.mubr.bf16.gmra.mrb[0].mxu0 %v324
    %v401 = vpop.f32.mrb[0].mxu0
    %v402 = vadd.f32 %v284, %v401
    %v403 = vpop.f32.mrb[0].mxu0
    %v404 = vpop.f32.mrb[0].mxu0
    %v405 = vadd.f32 %v284, %v404
    %v406 = vpop.f32.mrb[0].mxu0
    %407 = vmatprep.mubr.bf16.mxu0 0
    %408 = vmatmul.mubr.bf16.gmra.mrb[0].mxu0 %v327
    %v409 = vpop.f32.mrb[0].mxu0
    %v410 = vadd.f32 %v284, %v409
    %v411 = vpop.f32.mrb[0].mxu0
    %v412 = vpop.f32.mrb[0].mxu0
    %v413 = vadd.f32 %v284, %v412
    %v414 = vpop.f32.mrb[0].mxu0
    %415 = vmatprep.mubr.bf16.mxu0 0
    %416 = vmatmul.mubr.bf16.gmra.mrb[0].mxu0 %v330
    %v417 = vpop.f32.mrb[0].mxu0
    %v418 = vadd.f32 %v284, %v417
    %v419 = vpop.f32.mrb[0].mxu0
    %v420 = vpop.f32.mrb[0].mxu0
    %v421 = vadd.f32 %v284, %v420
    %v422 = vpop.f32.mrb[0].mxu0
    %423 = vmatprep.mubr.bf16.mxu0 0
    %424 = vmatmul.mubr.bf16.gmra.mrb[0].mxu0 %v333
    %v425 = vpop.f32.mrb[0].mxu0
    %v426 = vadd.f32 %v284, %v425
    %v427 = vpop.f32.mrb[0].mxu0
    %v428 = vpop.f32.mrb[0].mxu0
    %v429 = vadd.f32 %v284, %v428
    %v430 = vpop.f32.mrb[0].mxu0
    %431 = vdwg.mxu0
    %v432 = vmax.f32 %v370, 0.0
    %v433 = vmax.f32 %v373, 0.0
    %v434 = vmax.f32 %v378, 0.0
    %v435 = vmax.f32 %v381, 0.0
    %v436 = vmax.f32 %v386, 0.0
    %v437 = vmax.f32 %v389, 0.0
    %v438 = vmax.f32 %v394, 0.0
    %v439 = vmax.f32 %v397, 0.0
    %v440 = vmax.f32 %v402, 0.0
    %v441 = vmax.f32 %v405, 0.0
    %v442 = vmax.f32 %v410, 0.0
    %v443 = vmax.f32 %v413, 0.0
    %v444 = vmax.f32 %v418, 0.0
    %v445 = vmax.f32 %v421, 0.0
    %v446 = vmax.f32 %v426, 0.0
    %v447 = vmax.f32 %v429, 0.0
    %v448 = vpack.c.bf16 %v433, %v432
    %v449 = vpack.c.bf16 %v435, %v434
    %v450 = vpack.c.bf16 %v437, %v436
    %v451 = vpack.c.bf16 %v439, %v438
    %v452 = vpack.c.bf16 %v441, %v440
    %v453 = vpack.c.bf16 %v443, %v442
    %v454 = vpack.c.bf16 %v445, %v444
    %v455 = vpack.c.bf16 %v447, %v446
    %457 = vset.pattern.permute.xlu0 0
    %458 = vperm.xlu0 %457, %v46
    %v459 = vpop.permute.xlu0 %458
    %vm461 = vcmask 261120
    %v463 = vsel %vm461, %v45, 0
    %v466 = vsel %vm461, %v448, 0
    %v469 = vsel %vm461, %v449, 0
    %v472 = vsel %vm461, %v450, 0
    %v475 = vsel %vm461, %v451, 0
    %v478 = vsel %vm461, %v452, 0
    %v481 = vsel %vm461, %v453, 0
    %v484 = vsel %vm461, %v454, 0
    %v487 = vsel %vm461, %v455, 0
    %489 = vmatprep.subr.bf16.mxu0 0
    %490 = vmatpush1.bf16.xpose.msra.mxu0 %v466
    %491 = vmatprep.subr.bf16.mxu0 0
    %492 = vmatpush1.bf16.xpose.msra.mxu0 %v469
    %493 = vmatprep.subr.bf16.mxu0 0
    %494 = vmatpush1.bf16.xpose.msra.mxu0 %v472
    %495 = vmatprep.subr.bf16.mxu0 0
    %496 = vmatpush1.bf16.xpose.msra.mxu0 %v475
    %497 = vmatprep.subr.bf16.mxu0 0
    %498 = vmatpush1.bf16.xpose.msra.mxu0 %v478
    %499 = vmatprep.subr.bf16.mxu0 0
    %500 = vmatpush1.bf16.xpose.msra.mxu0 %v481
    %501 = vmatprep.subr.bf16.mxu0 0
    %502 = vmatpush1.bf16.xpose.msra.mxu0 %v484
    %503 = vmatprep.subr.bf16.mxu0 0
    %504 = vmatpush1.bf16.xpose.msra.mxu0 %v487
    %505 = vmatprep.subr.bf16.mxu0 0
    %506 = vmatpush1.bf16.xpose.msra.mxu0 0
    %507 = vmatprep.subr.bf16.mxu0 0
    %508 = vmatpush1.bf16.xpose.msra.mxu0 0
    %509 = vmatprep.subr.bf16.mxu0 0
    %510 = vmatpush1.bf16.xpose.msra.mxu0 0
    %511 = vmatprep.subr.bf16.mxu0 0
    %512 = vmatpush1.bf16.xpose.msra.mxu0 0
    %513 = vmatprep.subr.bf16.mxu0 0
    %514 = vmatpush1.bf16.xpose.msra.mxu0 0
    %515 = vmatprep.subr.bf16.mxu0 0
    %516 = vmatpush1.bf16.xpose.msra.mxu0 0
    %517 = vmatprep.subr.bf16.mxu0 0
    %518 = vmatpush1.bf16.xpose.msra.mxu0 0
    %519 = vmatprep.subr.bf16.mxu0 0
    %520 = vmatpush1.bf16.xpose.msra.mxu0 0
    %521 = vmatprep.mubr.bf16.mxu0 0
    %522 = vmatmul.mubr.bf16.gmra.mrb[0].mxu0 %v463
    %v523 = vpop.f32.mrb[0].mxu0
    %v524 = vadd.f32 %v459, %v523
    %v525 = vpop.f32.mrb[0].mxu0
    %v526 = vpop.f32.mrb[0].mxu0
    %v527 = vpop.f32.mrb[0].mxu0
    %528 = vdwg.mxu0
    %v529 = vmax.f32 %v524, 0.0
    %530 = vst [vmem:[#allocation2] sm:$0x7] %v529
    %s531 = scalar_lea.vmem %s0, 64
    %v532 = vld [vmem:[%s531] sm:$0xf]
    %v533 = vld [vmem:[%s531 + $0x4] sm:$0xf]
    %v534 = vld [vmem:[%s531 + $0x8] sm:$0xf]
    %v535 = vld [vmem:[%s531 + $0xc] sm:$0xf]
    %v536 = vld [vmem:[%s531 + $0x10] sm:$0xf]
    %v537 = vld [vmem:[%s531 + $0x14] sm:$0xf]
    %v538 = vld [vmem:[%s531 + $0x18] sm:$0xf]
    %v539 = vld [vmem:[%s531 + $0x1c] sm:$0xf]
    %v540 = vld [vmem:[%s531 + $0x20] sm:$0xf]
    %v541 = vld [vmem:[%s531 + $0x24] sm:$0xf]
    %v542 = vld [vmem:[%s531 + $0x28] sm:$0xf]
    %v543 = vld [vmem:[%s531 + $0x2c] sm:$0xf]
    %v544 = vld [vmem:[%s531 + $0x30] sm:$0xf]
    %v545 = vld [vmem:[%s531 + $0x34] sm:$0xf]
    %v546 = vld [vmem:[%s531 + $0x38] sm:$0xf]
    %v547 = vld [vmem:[%s531 + $0x3c] sm:$0xf]
    %v564 = vunpack.c.l.b16 %v532
    %v565 = vunpack.c.l.b16 %v533
    %v566 = vunpack.c.l.b16 %v534
    %v567 = vunpack.c.l.b16 %v535
    %v568 = vunpack.c.l.b16 %v536
    %v569 = vunpack.c.l.b16 %v537
    %v570 = vunpack.c.l.b16 %v538
    %v571 = vunpack.c.l.b16 %v539
    %v572 = vunpack.c.l.b16 %v540
    %v573 = vunpack.c.l.b16 %v541
    %v574 = vunpack.c.l.b16 %v542
    %v575 = vunpack.c.l.b16 %v543
    %v576 = vunpack.c.l.b16 %v544
    %v577 = vunpack.c.l.b16 %v545
    %v578 = vunpack.c.l.b16 %v546
    %v579 = vunpack.c.l.b16 %v547
    %v580 = vpack.c.b16 %v565, %v564
    %v581 = vpack.c.b16 %v567, %v566
    %v582 = vpack.c.b16 %v569, %v568
    %v583 = vpack.c.b16 %v571, %v570
    %v584 = vpack.c.b16 %v573, %v572
    %v585 = vpack.c.b16 %v575, %v574
    %v586 = vpack.c.b16 %v577, %v576
    %v587 = vpack.c.b16 %v579, %v578
    %v589 = vsel %vm130, %v580, 0
    %v592 = vsel %vm130, %v581, 0
    %v595 = vsel %vm130, %v582, 0
    %v598 = vsel %vm130, %v583, 0
    %v601 = vsel %vm130, %v584, 0
    %v604 = vsel %vm130, %v585, 0
    %v607 = vsel %vm130, %v586, 0
    %v610 = vsel %vm130, %v587, 0
    %612 = vmatprep.subr.bf16.mxu0 0
    %613 = vmatpush1.bf16.msra.mxu0 %v123
    %614 = vmatprep.subr.bf16.mxu0 0
    %615 = vmatpush1.bf16.msra.mxu0 %v124
    %616 = vmatprep.subr.bf16.mxu0 0
    %617 = vmatpush1.bf16.msra.mxu0 %v125
    %618 = vmatprep.subr.bf16.mxu0 0
    %619 = vmatpush1.bf16.msra.mxu0 %v157
    %620 = vmatprep.subr.bf16.mxu0 0
    %621 = vmatpush1.bf16.msra.mxu0 0
    %622 = vmatprep.subr.bf16.mxu0 0
    %623 = vmatpush1.bf16.msra.mxu0 0
    %624 = vmatprep.subr.bf16.mxu0 0
    %625 = vmatpush1.bf16.msra.mxu0 0
    %626 = vmatprep.subr.bf16.mxu0 0
    %627 = vmatpush1.bf16.msra.mxu0 0
    %628 = vmatprep.subr.bf16.mxu0 0
    %629 = vmatpush1.bf16.msra.mxu0 0
    %630 = vmatprep.subr.bf16.mxu0 0
    %631 = vmatpush1.bf16.msra.mxu0 0
    %632 = vmatprep.subr.bf16.mxu0 0
    %633 = vmatpush1.bf16.msra.mxu0 0
    %634 = vmatprep.subr.bf16.mxu0 0
    %635 = vmatpush1.bf16.msra.mxu0 0
    %636 = vmatprep.subr.bf16.mxu0 0
    %637 = vmatpush1.bf16.msra.mxu0 0
    %638 = vmatprep.subr.bf16.mxu0 0
    %639 = vmatpush1.bf16.msra.mxu0 0
    %640 = vmatprep.subr.bf16.mxu0 0
    %641 = vmatpush1.bf16.msra.mxu0 0
    %642 = vmatprep.subr.bf16.mxu0 0
    %643 = vmatpush1.bf16.msra.mxu0 0
    %644 = vmatprep.mubr.bf16.mxu0 0
    %645 = vmatmul.mubr.bf16.gmra.mrb[0].mxu0 %v589
    %v646 = vpop.f32.mrb[0].mxu0
    %v647 = vadd.f32 %v67, %v646
    %v648 = vpop.f32.mrb[0].mxu0
    %v649 = vpop.f32.mrb[0].mxu0
    %v650 = vadd.f32 %v67, %v649
    %v651 = vpop.f32.mrb[0].mxu0
    %652 = vmatprep.mubr.bf16.mxu0 0
    %653 = vmatmul.mubr.bf16.gmra.mrb[0].mxu0 %v592
    %v654 = vpop.f32.mrb[0].mxu0
    %v655 = vadd.f32 %v67, %v654
    %v656 = vpop.f32.mrb[0].mxu0
    %v657 = vpop.f32.mrb[0].mxu0
    %v658 = vadd.f32 %v67, %v657
    %v659 = vpop.f32.mrb[0].mxu0
    %660 = vmatprep.mubr.bf16.mxu0 0
    %661 = vmatmul.mubr.bf16.gmra.mrb[0].mxu0 %v595
    %v662 = vpop.f32.mrb[0].mxu0
    %v663 = vadd.f32 %v67, %v662
    %v664 = vpop.f32.mrb[0].mxu0
    %v665 = vpop.f32.mrb[0].mxu0
    %v666 = vadd.f32 %v67, %v665
    %v667 = vpop.f32.mrb[0].mxu0
    %668 = vmatprep.mubr.bf16.mxu0 0
    %669 = vmatmul.mubr.bf16.gmra.mrb[0].mxu0 %v598
    %v670 = vpop.f32.mrb[0].mxu0
    %v671 = vadd.f32 %v67, %v670
    %v672 = vpop.f32.mrb[0].mxu0
    %v673 = vpop.f32.mrb[0].mxu0
    %v674 = vadd.f32 %v67, %v673
    %v675 = vpop.f32.mrb[0].mxu0
    %676 = vmatprep.mubr.bf16.mxu0 0
    %677 = vmatmul.mubr.bf16.gmra.mrb[0].mxu0 %v601
    %v678 = vpop.f32.mrb[0].mxu0
    %v679 = vadd.f32 %v67, %v678
    %v680 = vpop.f32.mrb[0].mxu0
    %v681 = vpop.f32.mrb[0].mxu0
    %v682 = vadd.f32 %v67, %v681
    %v683 = vpop.f32.mrb[0].mxu0
    %684 = vmatprep.mubr.bf16.mxu0 0
    %685 = vmatmul.mubr.bf16.gmra.mrb[0].mxu0 %v604
    %v686 = vpop.f32.mrb[0].mxu0
    %v687 = vadd.f32 %v67, %v686
    %v688 = vpop.f32.mrb[0].mxu0
    %v689 = vpop.f32.mrb[0].mxu0
    %v690 = vadd.f32 %v67, %v689
    %v691 = vpop.f32.mrb[0].mxu0
    %692 = vmatprep.mubr.bf16.mxu0 0
    %693 = vmatmul.mubr.bf16.gmra.mrb[0].mxu0 %v607
    %v694 = vpop.f32.mrb[0].mxu0
    %v695 = vadd.f32 %v67, %v694
    %v696 = vpop.f32.mrb[0].mxu0
    %v697 = vpop.f32.mrb[0].mxu0
    %v698 = vadd.f32 %v67, %v697
    %v699 = vpop.f32.mrb[0].mxu0
    %700 = vmatprep.mubr.bf16.mxu0 0
    %701 = vmatmul.mubr.bf16.gmra.mrb[0].mxu0 %v610
    %v702 = vpop.f32.mrb[0].mxu0
    %v703 = vadd.f32 %v67, %v702
    %v704 = vpop.f32.mrb[0].mxu0
    %v705 = vpop.f32.mrb[0].mxu0
    %v706 = vadd.f32 %v67, %v705
    %v707 = vpop.f32.mrb[0].mxu0
    %708 = vdwg.mxu0
    %v709 = vmax.f32 %v647, 0.0
    %v710 = vmax.f32 %v650, 0.0
    %v711 = vmax.f32 %v655, 0.0
    %v712 = vmax.f32 %v658, 0.0
    %v713 = vmax.f32 %v663, 0.0
    %v714 = vmax.f32 %v666, 0.0
    %v715 = vmax.f32 %v671, 0.0
    %v716 = vmax.f32 %v674, 0.0
    %v717 = vmax.f32 %v679, 0.0
    %v718 = vmax.f32 %v682, 0.0
    %v719 = vmax.f32 %v687, 0.0
    %v720 = vmax.f32 %v690, 0.0
    %v721 = vmax.f32 %v695, 0.0
    %v722 = vmax.f32 %v698, 0.0
    %v723 = vmax.f32 %v703, 0.0
    %v724 = vmax.f32 %v706, 0.0
    %v725 = vpack.c.bf16 %v710, %v709
    %v726 = vpack.c.bf16 %v712, %v711
    %v727 = vpack.c.bf16 %v714, %v713
    %v728 = vpack.c.bf16 %v716, %v715
    %v729 = vpack.c.bf16 %v718, %v717
    %v730 = vpack.c.bf16 %v720, %v719
    %v731 = vpack.c.bf16 %v722, %v721
    %v732 = vpack.c.bf16 %v724, %v723
    %v734 = vsel %vm310, %v725, 0
    %v737 = vsel %vm310, %v726, 0
    %v740 = vsel %vm310, %v727, 0
    %v743 = vsel %vm310, %v728, 0
    %v746 = vsel %vm310, %v729, 0
    %v749 = vsel %vm310, %v730, 0
    %v752 = vsel %vm310, %v731, 0
    %v755 = vsel %vm310, %v732, 0
    %757 = vmatprep.subr.bf16.mxu0 0
    %758 = vmatpush1.bf16.msra.mxu0 %v302
    %759 = vmatprep.subr.bf16.mxu0 0
    %760 = vmatpush1.bf16.msra.mxu0 %v303
    %761 = vmatprep.subr.bf16.mxu0 0
    %762 = vmatpush1.bf16.msra.mxu0 %v304
    %763 = vmatprep.subr.bf16.mxu0 0
    %764 = vmatpush1.bf16.msra.mxu0 %v305
    %765 = vmatprep.subr.bf16.mxu0 0
    %766 = vmatpush1.bf16.msra.mxu0 0
    %767 = vmatprep.subr.bf16.mxu0 0
    %768 = vmatpush1.bf16.msra.mxu0 0
    %769 = vmatprep.subr.bf16.mxu0 0
    %770 = vmatpush1.bf16.msra.mxu0 0
    %771 = vmatprep.subr.bf16.mxu0 0
    %772 = vmatpush1.bf16.msra.mxu0 0
    %773 = vmatprep.subr.bf16.mxu0 0
    %774 = vmatpush1.bf16.msra.mxu0 0
    %775 = vmatprep.subr.bf16.mxu0 0
    %776 = vmatpush1.bf16.msra.mxu0 0
    %777 = vmatprep.subr.bf16.mxu0 0
    %778 = vmatpush1.bf16.msra.mxu0 0
    %779 = vmatprep.subr.bf16.mxu0 0
    %780 = vmatpush1.bf16.msra.mxu0 0
    %781 = vmatprep.subr.bf16.mxu0 0
    %782 = vmatpush1.bf16.msra.mxu0 0
    %783 = vmatprep.subr.bf16.mxu0 0
    %784 = vmatpush1.bf16.msra.mxu0 0
    %785 = vmatprep.subr.bf16.mxu0 0
    %786 = vmatpush1.bf16.msra.mxu0 0
    %787 = vmatprep.subr.bf16.mxu0 0
    %788 = vmatpush1.bf16.msra.mxu0 0
    %789 = vmatprep.mubr.bf16.mxu0 0
    %790 = vmatmul.mubr.bf16.gmra.mrb[0].mxu0 %v734
    %v791 = vpop.f32.mrb[0].mxu0
    %v792 = vadd.f32 %v284, %v791
    %v793 = vpop.f32.mrb[0].mxu0
    %v794 = vpop.f32.mrb[0].mxu0
    %v795 = vadd.f32 %v284, %v794
    %v796 = vpop.f32.mrb[0].mxu0
    %797 = vmatprep.mubr.bf16.mxu0 0
    %798 = vmatmul.mubr.bf16.gmra.mrb[0].mxu0 %v737
    %v799 = vpop.f32.mrb[0].mxu0
    %v800 = vadd.f32 %v284, %v799
    %v801 = vpop.f32.mrb[0].mxu0
    %v802 = vpop.f32.mrb[0].mxu0
    %v803 = vadd.f32 %v284, %v802
    %v804 = vpop.f32.mrb[0].mxu0
    %805 = vmatprep.mubr.bf16.mxu0 0
    %806 = vmatmul.mubr.bf16.gmra.mrb[0].mxu0 %v740
    %v807 = vpop.f32.mrb[0].mxu0
    %v808 = vadd.f32 %v284, %v807
    %v809 = vpop.f32.mrb[0].mxu0
    %v810 = vpop.f32.mrb[0].mxu0
    %v811 = vadd.f32 %v284, %v810
    %v812 = vpop.f32.mrb[0].mxu0
    %813 = vmatprep.mubr.bf16.mxu0 0
    %814 = vmatmul.mubr.bf16.gmra.mrb[0].mxu0 %v743
    %v815 = vpop.f32.mrb[0].mxu0
    %v816 = vadd.f32 %v284, %v815
    %v817 = vpop.f32.mrb[0].mxu0
    %v818 = vpop.f32.mrb[0].mxu0
    %v819 = vadd.f32 %v284, %v818
    %v820 = vpop.f32.mrb[0].mxu0
    %821 = vmatprep.mubr.bf16.mxu0 0
    %822 = vmatmul.mubr.bf16.gmra.mrb[0].mxu0 %v746
    %v823 = vpop.f32.mrb[0].mxu0
    %v824 = vadd.f32 %v284, %v823
    %v825 = vpop.f32.mrb[0].mxu0
    %v826 = vpop.f32.mrb[0].mxu0
    %v827 = vadd.f32 %v284, %v826
    %v828 = vpop.f32.mrb[0].mxu0
    %829 = vmatprep.mubr.bf16.mxu0 0
    %830 = vmatmul.mubr.bf16.gmra.mrb[0].mxu0 %v749
    %v831 = vpop.f32.mrb[0].mxu0
    %v832 = vadd.f32 %v284, %v831
    %v833 = vpop.f32.mrb[0].mxu0
    %v834 = vpop.f32.mrb[0].mxu0
    %v835 = vadd.f32 %v284, %v834
    %v836 = vpop.f32.mrb[0].mxu0
    %837 = vmatprep.mubr.bf16.mxu0 0
    %838 = vmatmul.mubr.bf16.gmra.mrb[0].mxu0 %v752
    %v839 = vpop.f32.mrb[0].mxu0
    %v840 = vadd.f32 %v284, %v839
    %v841 = vpop.f32.mrb[0].mxu0
    %v842 = vpop.f32.mrb[0].mxu0
    %v843 = vadd.f32 %v284, %v842
    %v844 = vpop.f32.mrb[0].mxu0
    %845 = vmatprep.mubr.bf16.mxu0 0
    %846 = vmatmul.mubr.bf16.gmra.mrb[0].mxu0 %v755
    %v847 = vpop.f32.mrb[0].mxu0
    %v848 = vadd.f32 %v284, %v847
    %v849 = vpop.f32.mrb[0].mxu0
    %v850 = vpop.f32.mrb[0].mxu0
    %v851 = vadd.f32 %v284, %v850
    %v852 = vpop.f32.mrb[0].mxu0
    %853 = vdwg.mxu0
    %v854 = vmax.f32 %v792, 0.0
    %v855 = vmax.f32 %v795, 0.0
    %v856 = vmax.f32 %v800, 0.0
    %v857 = vmax.f32 %v803, 0.0
    %v858 = vmax.f32 %v808, 0.0
    %v859 = vmax.f32 %v811, 0.0
    %v860 = vmax.f32 %v816, 0.0
    %v861 = vmax.f32 %v819, 0.0
    %v862 = vmax.f32 %v824, 0.0
    %v863 = vmax.f32 %v827, 0.0
    %v864 = vmax.f32 %v832, 0.0
    %v865 = vmax.f32 %v835, 0.0
    %v866 = vmax.f32 %v840, 0.0
    %v867 = vmax.f32 %v843, 0.0
    %v868 = vmax.f32 %v848, 0.0
    %v869 = vmax.f32 %v851, 0.0
    %v870 = vpack.c.bf16 %v855, %v854
    %v871 = vpack.c.bf16 %v857, %v856
    %v872 = vpack.c.bf16 %v859, %v858
    %v873 = vpack.c.bf16 %v861, %v860
    %v874 = vpack.c.bf16 %v863, %v862
    %v875 = vpack.c.bf16 %v865, %v864
    %v876 = vpack.c.bf16 %v867, %v866
    %v877 = vpack.c.bf16 %v869, %v868
    %v879 = vsel %vm461, %v870, 0
    %v882 = vsel %vm461, %v871, 0
    %v885 = vsel %vm461, %v872, 0
    %v888 = vsel %vm461, %v873, 0
    %v891 = vsel %vm461, %v874, 0
    %v894 = vsel %vm461, %v875, 0
    %v897 = vsel %vm461, %v876, 0
    %v900 = vsel %vm461, %v877, 0
    %902 = vmatprep.subr.bf16.mxu0 0
    %903 = vmatpush1.bf16.xpose.msra.mxu0 %v879
    %904 = vmatprep.subr.bf16.mxu0 0
    %905 = vmatpush1.bf16.xpose.msra.mxu0 %v882
    %906 = vmatprep.subr.bf16.mxu0 0
    %907 = vmatpush1.bf16.xpose.msra.mxu0 %v885
    %908 = vmatprep.subr.bf16.mxu0 0
    %909 = vmatpush1.bf16.xpose.msra.mxu0 %v888
    %910 = vmatprep.subr.bf16.mxu0 0
    %911 = vmatpush1.bf16.xpose.msra.mxu0 %v891
    %912 = vmatprep.subr.bf16.mxu0 0
    %913 = vmatpush1.bf16.xpose.msra.mxu0 %v894
    %914 = vmatprep.subr.bf16.mxu0 0
    %915 = vmatpush1.bf16.xpose.msra.mxu0 %v897
    %916 = vmatprep.subr.bf16.mxu0 0
    %917 = vmatpush1.bf16.xpose.msra.mxu0 %v900
    %918 = vmatprep.subr.bf16.mxu0 0
    %919 = vmatpush1.bf16.xpose.msra.mxu0 0
    %920 = vmatprep.subr.bf16.mxu0 0
    %921 = vmatpush1.bf16.xpose.msra.mxu0 0
    %922 = vmatprep.subr.bf16.mxu0 0
    %923 = vmatpush1.bf16.xpose.msra.mxu0 0
    %924 = vmatprep.subr.bf16.mxu0 0
    %925 = vmatpush1.bf16.xpose.msra.mxu0 0
    %926 = vmatprep.subr.bf16.mxu0 0
    %927 = vmatpush1.bf16.xpose.msra.mxu0 0
    %928 = vmatprep.subr.bf16.mxu0 0
    %929 = vmatpush1.bf16.xpose.msra.mxu0 0
    %930 = vmatprep.subr.bf16.mxu0 0
    %931 = vmatpush1.bf16.xpose.msra.mxu0 0
    %932 = vmatprep.subr.bf16.mxu0 0
    %933 = vmatpush1.bf16.xpose.msra.mxu0 0
    %934 = vmatprep.mubr.bf16.mxu0 0
    %935 = vmatmul.mubr.bf16.gmra.mrb[0].mxu0 %v463
    %v936 = vpop.f32.mrb[0].mxu0
    %v937 = vadd.f32 %v459, %v936
    %v938 = vpop.f32.mrb[0].mxu0
    %v939 = vpop.f32.mrb[0].mxu0
    %v940 = vpop.f32.mrb[0].mxu0
    %941 = vdwg.mxu0
    %v942 = vmax.f32 %v937, 0.0
    %s943 = scalar_lea.vmem [#allocation2], 4
    %944 = vst [vmem:[%s943] sm:$0x7] %v942
    // Predicated region
    $region30: #{tpu_custom_call.1} parent=1 // pred_check
      _
    $region31: #{tpu_custom_call.1} parent=1 // pred_check_branch
      %946 = sbr.rel (0) target = $region33
    $region32: #{tpu_custom_call.1} parent=1 // pred_region
      %s948 = ssub.s32 128, 128
      %949 = vsyncadd [#allocation3], %s948
      %s951 = sshll.u32 [#allocation2], 4
      %s952 = int_to_ptr.vmem [resolvable:$true] %s951
      %954 = dma.vmem_to_hbm [thread:$0]  %s952, 128, %s7, [#allocation3]
    $region33: #{tpu_custom_call.1} parent=1 // pred_fallthru
      _
    // Predicated region
    $region34: #{tpu_custom_call.1} parent=1 // pred_check
      _
    $region35: #{tpu_custom_call.1} parent=1 // pred_check_branch
      %956 = sbr.rel (0) target = $region37
    $region36: #{tpu_custom_call.1} parent=1 // pred_region
      %957 = dma.done [#allocation3], 128
    $region37: #{tpu_custom_call.1} parent=1 // pred_fallthru
      _
    %958 = vsyncpa [#allocation3], 1

</llo_original>
